<compile_context>
chip_gen: v6e
topology: v6e:2x2x1
jax: 0.10.0
libtpu: 0.0.40
codegen_flags: <defaults>
</compile_context>

<pallas_src>
import functools

import jax
import jax.numpy as jnp
from jax import lax
from jax.experimental import pallas as pl
from jax.experimental.pallas import tpu as pltpu


def _round_up(v, m):
    return ((v + m - 1) // m) * m


def _dice_partial_kernel(x_ref, t_ref, inter_ref, sum_ref, *, rb, r_total):
    """x_ref/t_ref: (1, rb, 128) block of one batch row's reshaped data.
    inter_ref/sum_ref: (1, 8, 128) f32 per-batch accumulators, resident across
    the reduction ("arbitrary") grid axis."""
    r = pl.program_id(1)

    @pl.when(r == 0)
    def _init():
        inter_ref[...] = jnp.zeros_like(inter_ref)
        sum_ref[...] = jnp.zeros_like(sum_ref)

    def _accumulate(mask_rows):
        x = x_ref[0].astype(jnp.float32)   # (rb, 128)
        y = t_ref[0].astype(jnp.float32)
        if mask_rows:
            # Ragged last row-block: rows past r_total hold undefined data.
            row = r * rb + lax.broadcasted_iota(jnp.int32, (rb, 128), 0)
            valid = row < r_total
            x = jnp.where(valid, x, 0.0)
            y = jnp.where(valid, y, 0.0)
        # Leading-axis reduce of a (rb//8, 8, 128) view = pure vreg adds (VPU),
        # accumulating into a lane-dense (8,128) per-batch partial.
        inter_ref[0] += (x * y).reshape(rb // 8, 8, 128).sum(axis=0)
        sum_ref[0] += (x + y).reshape(rb // 8, 8, 128).sum(axis=0)

    if r_total % rb != 0:
        last = pl.num_programs(1) - 1

        @pl.when(r == last)
        def _ragged():
            _accumulate(True)

        @pl.when(r < last)
        def _full():
            _accumulate(False)
    else:
        _accumulate(False)


def _choose_tiling(r_total, itemsize_x, itemsize_t, rows_per_block):
    """Pick rows-per-block (multiple of 8, <= r_total) and a VMEM limit."""
    try:
        phys_vmem = int(getattr(pltpu.get_tpu_info(), "vmem_capacity_bytes",
                                64 * 1024 * 1024))
    except Exception:  # conservative default (v7x per-TC VMEM)
        phys_vmem = 64 * 1024 * 1024

    if rows_per_block is None:
        # ~6 MiB per-input block on 64 MiB-VMEM chips (v7x), ~12 MiB otherwise
        # (v5e/v6e have 128 MiB physical VMEM).
        per_block_target = (6 * 1024 * 1024 if phys_vmem <= 64 * 1024 * 1024
                            else 12 * 1024 * 1024)
        rb = per_block_target // (128 * max(itemsize_x, itemsize_t))
    else:
        rb = rows_per_block

    rb_max = max(8, (r_total // 8) * 8)      # keep block <= array extent
    rb = max(8, min((rb // 8) * 8, rb_max))

    # Pipeline working set: 2 inputs x 2 buffers x block (+ tiny accumulators).
    working = 2 * rb * 128 * (itemsize_x + itemsize_t) + 64 * 1024
    vmem_limit = min(max(32 * 1024 * 1024, working + 16 * 1024 * 1024),
                     phys_vmem - 8 * 1024 * 1024)
    return rb, int(vmem_limit)


def dice_loss_pallas(inp, target, *, rows_per_block=None):
    """Pallas equivalent of DiceLoss_src.forward(input, target)."""
    n = inp.shape[0]
    x = inp.reshape(n, -1)
    t = target.reshape(n, -1)
    d = x.shape[1]

    d_main = (d // 128) * 128
    r_total = d_main // 128
    smooth = jnp.float32(1.0)

    # ---- d % 128 column tail: tiny plain-JAX reduction (no jnp.pad copy) ----
    if d_main < d:
        xt = x[:, d_main:].astype(jnp.float32)
        tt = t[:, d_main:].astype(jnp.float32)
        inter_tail = jnp.sum(xt * tt, axis=1)
        sum_tail = jnp.sum(xt + tt, axis=1)
    else:
        inter_tail = jnp.zeros((n,), jnp.float32)
        sum_tail = jnp.zeros((n,), jnp.float32)

    if r_total < 8:
        # Too small to be worth a kernel launch: do everything in JAX.
        xf = x.astype(jnp.float32)
        tf = t.astype(jnp.float32)
        inter = jnp.sum(xf * tf, axis=1)
        sxt = jnp.sum(xf + tf, axis=1)
    else:
        # (n, d_main) -> (n, r_total, 128); no-op when d is a multiple of 128.
        xm = x[:, :d_main].reshape(n, r_total, 128)
        tm = t[:, :d_main].reshape(n, r_total, 128)

        rb, vmem_limit = _choose_tiling(r_total, xm.dtype.itemsize,
                                        tm.dtype.itemsize, rows_per_block)
        num_r = pl.cdiv(r_total, rb)

        kernel = functools.partial(_dice_partial_kernel, rb=rb, r_total=r_total)
        acc_shape = jax.ShapeDtypeStruct((n, 8, 128), jnp.float32)

        inter_p, sum_p = pl.pallas_call(
            kernel,
            out_shape=(acc_shape, acc_shape),
            grid_spec=pltpu.PrefetchScalarGridSpec(
                num_scalar_prefetch=0,
                grid=(n, num_r),
                in_specs=[
                    pl.BlockSpec((1, rb, 128), lambda b, r: (b, r, 0)),
                    pl.BlockSpec((1, rb, 128), lambda b, r: (b, r, 0)),
                ],
                out_specs=(
                    pl.BlockSpec((1, 8, 128), lambda b, r: (b, 0, 0)),
                    pl.BlockSpec((1, 8, 128), lambda b, r: (b, 0, 0)),
                ),
            ),
            compiler_params=pltpu.CompilerParams(
                dimension_semantics=("parallel", "arbitrary"),
                vmem_limit_bytes=vmem_limit,
            ),
        )(xm, tm)

        # Cheap epilogue in plain JAX: collapse the 1024-wide partials.
        inter = jnp.sum(inter_p, axis=(1, 2)) + inter_tail
        sxt = jnp.sum(sum_p, axis=(1, 2)) + sum_tail

    dice = 2.0 * (inter + smooth) / (sxt + smooth)
    return (jnp.float32(1.0) - jnp.sum(dice) / jnp.float32(n)).astype(jnp.float32)


def dice_loss_ref(inp, target):
    """Pure-JAX reference mirroring the PyTorch module exactly."""
    n = target.shape[0]
    smooth = 1.0
    x = inp.reshape(n, -1).astype(jnp.float32)
    t = target.reshape(n, -1).astype(jnp.float32)
    inter = (x * t).sum(axis=1)
    loss = 2.0 * (inter + smooth) / (x.sum(axis=1) + t.sum(axis=1) + smooth)
    return 1.0 - loss.sum() / n


if __name__ == "__main__":
    key = jax.random.PRNGKey(0)
    k1, k2, k3, k4 = jax.random.split(key, 4)

    # Case 1: batch * w * h per-pixel probabilities, 128-aligned row length.
    N, W, H = 2, 64, 64
    inp = jax.nn.sigmoid(jax.random.normal(k1, (N, W, H), dtype=jnp.float32))
    target = (jax.random.uniform(k2, (N, W, H)) > 0.5).astype(jnp.float32)

    out = jax.block_until_ready(dice_loss_pallas(inp, target))
    ref = dice_loss_ref(inp, target)
    assert jnp.allclose(out, ref, atol=1e-5, rtol=1e-5), (out, ref)

    # Case 2: ragged row length (not a multiple of 128) + multi-step reduction
    # axis, exercising the in-kernel row mask and the plain-JAX column tail.
    N2, W2, H2 = 2, 33, 37
    inp2 = jax.nn.sigmoid(jax.random.normal(k3, (N2, W2, H2), dtype=jnp.float32))
    target2 = (jax.random.uniform(k4, (N2, W2, H2)) > 0.5).astype(jnp.float32)

    out2 = jax.block_until_ready(dice_loss_pallas(inp2, target2, rows_per_block=8))
    ref2 = dice_loss_ref(inp2, target2)
    assert jnp.allclose(out2, ref2, atol=1e-5, rtol=1e-5), (out2, ref2)

    print("KERNEL_OK")
</pallas_src>

<mosaic_0001>
module attributes {stable_mosaic.version = 11 : i64} {
  func.func @_dice_partial_kernel(%arg0: i32, %arg1: i32, %arg2: memref<1x32x128xf32, #tpu.memory_space<vmem>>, %arg3: memref<1x32x128xf32, #tpu.memory_space<vmem>>, %arg4: memref<1x8x128xf32, #tpu.memory_space<vmem>>, %arg5: memref<1x8x128xf32, #tpu.memory_space<vmem>>) attributes {dimension_semantics = [#tpu.dimension_semantics<parallel>, #tpu.dimension_semantics<arbitrary>], iteration_bounds = array<i64: 2, 1>, scalar_prefetch = 0 : i64, scratch_operands = 0 : i64, tpu.core_type = #tpu.core_type<tc>, window_params = [{transform_indices = @transform_0, window_bounds = array<i64: 1, 32, 128>}, {transform_indices = @transform_1, window_bounds = array<i64: 1, 32, 128>}, {transform_indices = @transform_2, window_bounds = array<i64: 1, 8, 128>}, {transform_indices = @transform_3, window_bounds = array<i64: 1, 8, 128>}]} {
    %c0_i32 = arith.constant 0 : i32
    %0 = arith.cmpi eq, %arg1, %c0_i32 : i32
    %1 = arith.extui %0 : i1 to i32
    %c0_i32_0 = arith.constant 0 : i32
    %2 = arith.cmpi ne, %1, %c0_i32_0 : i32
    scf.if %2 {
      %cst_19 = arith.constant 0.000000e+00 : f32
      %25 = vector.broadcast %cst_19 : f32 to vector<1x8x128xf32>
      %c0_20 = arith.constant 0 : index
      %c0_21 = arith.constant 0 : index
      %c0_22 = arith.constant 0 : index
      %26 = vector.load %arg4[%c0_20, %c0_21, %c0_22] : memref<1x8x128xf32, #tpu.memory_space<vmem>>, vector<1x8x128xf32>
      tpu.vector_store %arg4[%c0_20, %c0_21, %c0_22], %25 {strides = array<i32>} : memref<1x8x128xf32, #tpu.memory_space<vmem>>, vector<1x8x128xf32>,
      %cst_23 = arith.constant 0.000000e+00 : f32
      %27 = vector.broadcast %cst_23 : f32 to vector<1x8x128xf32>
      %c0_24 = arith.constant 0 : index
      %c0_25 = arith.constant 0 : index
      %c0_26 = arith.constant 0 : index
      %28 = vector.load %arg5[%c0_24, %c0_25, %c0_26] : memref<1x8x128xf32, #tpu.memory_space<vmem>>, vector<1x8x128xf32>
      tpu.vector_store %arg5[%c0_24, %c0_25, %c0_26], %27 {strides = array<i32>} : memref<1x8x128xf32, #tpu.memory_space<vmem>>, vector<1x8x128xf32>,
    } else {
    }
    %c0 = arith.constant 0 : index
    %c0_1 = arith.constant 0 : index
    %c0_2 = arith.constant 0 : index
    %3 = vector.load %arg2[%c0, %c0_1, %c0_2] : memref<1x32x128xf32, #tpu.memory_space<vmem>>, vector<1x32x128xf32>
    %4 = vector.shape_cast %3 : vector<1x32x128xf32> to vector<32x128xf32>
    %c0_3 = arith.constant 0 : index
    %c0_4 = arith.constant 0 : index
    %c0_5 = arith.constant 0 : index
    %5 = vector.load %arg3[%c0_3, %c0_4, %c0_5] : memref<1x32x128xf32, #tpu.memory_space<vmem>>, vector<1x32x128xf32>
    %6 = vector.shape_cast %5 : vector<1x32x128xf32> to vector<32x128xf32>
    %c0_6 = arith.constant 0 : index
    %c0_7 = arith.constant 0 : index
    %c0_8 = arith.constant 0 : index
    %7 = vector.load %arg4[%c0_6, %c0_7, %c0_8] : memref<1x8x128xf32, #tpu.memory_space<vmem>>, vector<1x8x128xf32>
    %8 = vector.shape_cast %7 : vector<1x8x128xf32> to vector<8x128xf32>
    %9 = arith.mulf %4, %6 : vector<32x128xf32>
    %10 = vector.shape_cast %9 : vector<32x128xf32> to vector<4x8x128xf32>
    %cst = arith.constant dense<0.000000e+00> : vector<8x128xf32>
    %11 = vector.multi_reduction <add>, %10, %cst [0] : vector<4x8x128xf32> to vector<8x128xf32>
    %12 = arith.addf %8, %11 : vector<8x128xf32>
    %c0_9 = arith.constant 0 : index
    %c0_10 = arith.constant 0 : index
    %c0_11 = arith.constant 0 : index
    %13 = vector.load %arg4[%c0_9, %c0_10, %c0_11] : memref<1x8x128xf32, #tpu.memory_space<vmem>>, vector<1x8x128xf32>
    %14 = vector.shape_cast %13 : vector<1x8x128xf32> to vector<8x128xf32>
    %15 = vector.shape_cast %12 : vector<8x128xf32> to vector<1x8x128xf32>
    tpu.vector_store %arg4[%c0_9, %c0_10, %c0_11], %15 {strides = array<i32>} : memref<1x8x128xf32, #tpu.memory_space<vmem>>, vector<1x8x128xf32>,
    %c0_12 = arith.constant 0 : index
    %c0_13 = arith.constant 0 : index
    %c0_14 = arith.constant 0 : index
    %16 = vector.load %arg5[%c0_12, %c0_13, %c0_14] : memref<1x8x128xf32, #tpu.memory_space<vmem>>, vector<1x8x128xf32>
    %17 = vector.shape_cast %16 : vector<1x8x128xf32> to vector<8x128xf32>
    %18 = arith.addf %4, %6 : vector<32x128xf32>
    %19 = vector.shape_cast %18 : vector<32x128xf32> to vector<4x8x128xf32>
    %cst_15 = arith.constant dense<0.000000e+00> : vector<8x128xf32>
    %20 = vector.multi_reduction <add>, %19, %cst_15 [0] : vector<4x8x128xf32> to vector<8x128xf32>
    %21 = arith.addf %17, %20 : vector<8x128xf32>
    %c0_16 = arith.constant 0 : index
    %c0_17 = arith.constant 0 : index
    %c0_18 = arith.constant 0 : index
    %22 = vector.load %arg5[%c0_16, %c0_17, %c0_18] : memref<1x8x128xf32, #tpu.memory_space<vmem>>, vector<1x8x128xf32>
    %23 = vector.shape_cast %22 : vector<1x8x128xf32> to vector<8x128xf32>
    %24 = vector.shape_cast %21 : vector<8x128xf32> to vector<1x8x128xf32>
    tpu.vector_store %arg5[%c0_16, %c0_17, %c0_18], %24 {strides = array<i32>} : memref<1x8x128xf32, #tpu.memory_space<vmem>>, vector<1x8x128xf32>,
    return
  }
  func.func @transform_0(%arg0: i32, %arg1: i32) -> (i32, i32, i32) {
    %c0_i32 = arith.constant 0 : i32
    %c0_i32_0 = arith.constant 0 : i32
    return %arg0, %arg1, %c0_i32 : i32, i32, i32
  }
  func.func @transform_1(%arg0: i32, %arg1: i32) -> (i32, i32, i32) {
    %c0_i32 = arith.constant 0 : i32
    %c0_i32_0 = arith.constant 0 : i32
    return %arg0, %arg1, %c0_i32 : i32, i32, i32
  }
  func.func @transform_2(%arg0: i32, %arg1: i32) -> (i32, i32, i32) {
    %c0_i32 = arith.constant 0 : i32
    %c0_i32_0 = arith.constant 0 : i32
    %c0_i32_1 = arith.constant 0 : i32
    return %arg0, %c0_i32, %c0_i32_0 : i32, i32, i32
  }
  func.func @transform_3(%arg0: i32, %arg1: i32) -> (i32, i32, i32) {
    %c0_i32 = arith.constant 0 : i32
    %c0_i32_0 = arith.constant 0 : i32
    %c0_i32_1 = arith.constant 0 : i32
    return %arg0, %c0_i32, %c0_i32_0 : i32, i32, i32
  }
}

</mosaic_0001>

<llo_original>
// kernel: tpu_custom_call.1
$region0: #{tpu_custom_call.1}
  #allocation0 [shape = 'u32[]', space=smem, size = 0x4, offset = 0x4, fixed_abs, tag = 'smem constant byte address 0x4 - core index']
  #allocation1 [shape = 'u32[144,128]{1,0:T(1,128)}', space=vmem, size = 0x12000, scoped, tag = 'internal scratch']
  %s0 = inlined_call_operand.hbm [shape: f32[2,32,128], index: 0, kind: input, shape index: {}]
  %s1 = inlined_call_operand.hbm [shape: f32[2,32,128], index: 1, kind: input, shape index: {}]
  %s2 = inlined_call_operand.hbm [shape: f32[2,8,128], index: 2, kind: output, shape index: {0}]
  %s3 = inlined_call_operand.hbm [shape: f32[2,8,128], index: 3, kind: output, shape index: {1}]
  %4 = xla_tuple %s2, %s3
  %s5 = sld [smem:[#allocation0]]
  $region61: #{tpu_custom_call.1} parent=0
    _
  %s7 = ssub.s32 1, %s5
  %s8 = scalar_select 0, %s7, %s5
  $region1: #{tpu_custom_call.1} parent=0
    #allocation2 [shape = 'u8[32768]{0}', space=vmem, size = 0x8000, scoped, tag = 'input window, operand 0']
    #allocation3 [shape = 's32[2]{0}', space=sflag, size = 0x8, scoped, tag = 'scoped memory for tpu_custom_call.1']
    #allocation4 [shape = 's32[2]{0}', space=sflag, size = 0x8, scoped, tag = 'scoped memory for tpu_custom_call.1']
    #allocation5 [shape = 'u8[32768]{0}', space=vmem, size = 0x8000, scoped, tag = 'input window, operand 1']
    #allocation6 [shape = 's32[2]{0}', space=sflag, size = 0x8, scoped, tag = 'scoped memory for tpu_custom_call.1']
    #allocation7 [shape = 'u8[8192]{0}', space=vmem, size = 0x2000, scoped, tag = 'output window, operand 0']
    #allocation8 [shape = 'u8[8192]{0}', space=vmem, size = 0x2000, scoped, tag = 'output window, operand 1']
    #allocation9 [shape = 's32[2]{0}', space=sflag, size = 0x8, scoped, tag = 'scoped memory for tpu_custom_call.1']
    %9 = vsyncpa [#allocation3], 0
    %s10 = scalar_lea.sflag [#allocation3], 1
    %11 = vsyncpa %s10, 0
    %12 = vsyncpa [#allocation6], 0
    %s13 = scalar_lea.sflag [#allocation6], 1
    %14 = vsyncpa %s13, 0
    %15 = vsyncpa [#allocation4], 0
    %s16 = scalar_lea.sflag [#allocation4], 1
    %17 = vsyncpa %s16, 0
    %18 = vsyncpa [#allocation9], 0
    %s19 = scalar_lea.sflag [#allocation9], 1
    %20 = vsyncpa %s19, 0
    loop: start=0, step=1, limit=4
    $region2: #{tpu_custom_call.1} parent=1 // loop_pre_header
      _
    $region3: #{tpu_custom_call.1} parent=1 // loop_header
      %s22 = sphi 0, %s26
      %p23 = scmp.ge.s32.totalorder %s22, 4
      %s29 = sphi 0, %s41
      %s30 = sphi 0, %s37
      %s31 = sphi 0, %s29
      %s32 = sphi 0, %s30
      %s33 = sphi 0, %s31
      %s34 = sphi 0, %s32
      %s46 = sphi 0, %s48
      %s49 = sphi 0, %s46
      %s50 = sphi 0, %s49
      %s66 = sphi 0, %s50
      %s74 = sphi 0, %s76
      %s77 = sphi 0, %s74
      %s78 = sphi 0, %s77
      %s94 = sphi 0, %s78
      %s100 = sphi 0, %s102
      %s103 = sphi 0, %s100
      %s104 = sphi 0, %s103
      %s120 = sphi 0, %s104
      %s126 = sphi 0, %s128
      %s129 = sphi 0, %s126
      %s130 = sphi 0, %s129
      %s146 = sphi 0, %s130
    $region4: #{tpu_custom_call.1} parent=1 // loop_header_branch
      %25 = sbr.rel (%p23) target = $region8
    $region5: #{tpu_custom_call.1} parent=1 // loop_body
      %s27 = ssub.s32 %s22, 1
      %s28 = ssub.s32 %s22, 2
      %s35 = sadd.s32 1, %s30
      %p36 = scmp.ge.s32.totalorder %s35, 1
      %s37 = scalar_select %p36, 0, %s35
      %s38 = sadd.s32 1, %s29
      %s39 = scalar_select %p36, %s38, %s29
      %p40 = scmp.ge.s32.totalorder %s39, 2
      %s41 = scalar_select %p40, 0, %s39
      %s42 = ssub.s32 %s29, %s41
      %s43 = ssub.s32 %s30, %s37
      %s44 = sor.u32 %s42, %s43
      %p45 = scmp.eq.s32.totalorder %s44, 0
      %s47 = sadd.s32 %s46, 1
      %s48 = scalar_select %p45, %s46, %s47
      %p51 = pneg %p45
      %p52 = scmp.eq.s32.totalorder %s22, 1
      %p53 = por %p51, %p52
      %p54 = scmp.ne.s32.totalorder %s46, %s49
      %p55 = scmp.eq.s32.totalorder %s22, 0
      %p56 = por %p54, %p55
      %p57 = scmp.ne.s32.totalorder %s46, %s49
      %p58 = scmp.eq.s32.totalorder %s27, 1
      %p59 = por %p57, %p58
      %p60 = scmp.ne.s32.totalorder %s49, %s50
      %p61 = scmp.eq.s32.totalorder %s27, 0
      %p62 = por %p60, %p61
      %p63 = scmp.ne.s32.totalorder %s49, %s50
      %p64 = scmp.eq.s32.totalorder %s28, 1
      %p65 = por %p63, %p64
      %p67 = scmp.ne.s32.totalorder %s50, %s66
      %p68 = scmp.eq.s32.totalorder %s28, 0
      %p69 = por %p67, %p68
      %s70 = ssub.s32 %s29, %s41
      %s71 = ssub.s32 %s30, %s37
      %s72 = sor.u32 %s70, %s71
      %p73 = scmp.eq.s32.totalorder %s72, 0
      %s75 = sadd.s32 %s74, 1
      %s76 = scalar_select %p73, %s74, %s75
      %p79 = pneg %p73
      %p80 = scmp.eq.s32.totalorder %s22, 1
      %p81 = por %p79, %p80
      %p82 = scmp.ne.s32.totalorder %s74, %s77
      %p83 = scmp.eq.s32.totalorder %s22, 0
      %p84 = por %p82, %p83
      %p85 = scmp.ne.s32.totalorder %s74, %s77
      %p86 = scmp.eq.s32.totalorder %s27, 1
      %p87 = por %p85, %p86
      %p88 = scmp.ne.s32.totalorder %s77, %s78
      %p89 = scmp.eq.s32.totalorder %s27, 0
      %p90 = por %p88, %p89
      %p91 = scmp.ne.s32.totalorder %s77, %s78
      %p92 = scmp.eq.s32.totalorder %s28, 1
      %p93 = por %p91, %p92
      %p95 = scmp.ne.s32.totalorder %s78, %s94
      %p96 = scmp.eq.s32.totalorder %s28, 0
      %p97 = por %p95, %p96
      %s98 = ssub.s32 %s29, %s41
      %p99 = scmp.eq.s32.totalorder %s98, 0
      %s101 = sadd.s32 %s100, 1
      %s102 = scalar_select %p99, %s100, %s101
      %p105 = pneg %p99
      %p106 = scmp.eq.s32.totalorder %s22, 1
      %p107 = por %p105, %p106
      %p108 = scmp.ne.s32.totalorder %s100, %s103
      %p109 = scmp.eq.s32.totalorder %s22, 0
      %p110 = por %p108, %p109
      %p111 = scmp.ne.s32.totalorder %s100, %s103
      %p112 = scmp.eq.s32.totalorder %s27, 1
      %p113 = por %p111, %p112
      %p114 = scmp.ne.s32.totalorder %s103, %s104
      %p115 = scmp.eq.s32.totalorder %s27, 0
      %p116 = por %p114, %p115
      %p117 = scmp.ne.s32.totalorder %s103, %s104
      %p118 = scmp.eq.s32.totalorder %s28, 1
      %p119 = por %p117, %p118
      %p121 = scmp.ne.s32.totalorder %s104, %s120
      %p122 = scmp.eq.s32.totalorder %s28, 0
      %p123 = por %p121, %p122
      %s124 = ssub.s32 %s29, %s41
      %p125 = scmp.eq.s32.totalorder %s124, 0
      %s127 = sadd.s32 %s126, 1
      %s128 = scalar_select %p125, %s126, %s127
      %p131 = pneg %p125
      %p132 = scmp.eq.s32.totalorder %s22, 1
      %p133 = por %p131, %p132
      %p134 = scmp.ne.s32.totalorder %s126, %s129
      %p135 = scmp.eq.s32.totalorder %s22, 0
      %p136 = por %p134, %p135
      %p137 = scmp.ne.s32.totalorder %s126, %s129
      %p138 = scmp.eq.s32.totalorder %s27, 1
      %p139 = por %p137, %p138
      %p140 = scmp.ne.s32.totalorder %s129, %s130
      %p141 = scmp.eq.s32.totalorder %s27, 0
      %p142 = por %p140, %p141
      %p143 = scmp.ne.s32.totalorder %s129, %s130
      %p144 = scmp.eq.s32.totalorder %s28, 1
      %p145 = por %p143, %p144
      %p147 = scmp.ne.s32.totalorder %s130, %s146
      %p148 = scmp.eq.s32.totalorder %s28, 0
      %p149 = por %p147, %p148
      %p150 = scmp.le.s32.totalorder 1, %s22
      %p151 = scmp.lt.s32.totalorder %s22, 3
      %p152 = pnand %p150, %p151
      %p153 = pneg %p152
      // Predicated region
      $region9: #{tpu_custom_call.1} parent=5 // pred_check
        _
      $region10: #{tpu_custom_call.1} parent=5 // pred_check_branch
        %155 = sbr.rel (%p152) target = $region12
      $region11: #{tpu_custom_call.1} parent=5 // pred_region
        %s156 = ssub.s32 %s22, 1
      $region12: #{tpu_custom_call.1} parent=5 // pred_fallthru
        _
      %p157 = scmp.lt.s32.totalorder %s22, 2
      // Predicated region
      $region13: #{tpu_custom_call.1} parent=5 // pred_check
        %p158 = pneg %p157
      $region14: #{tpu_custom_call.1} parent=5 // pred_check_branch
        %160 = sbr.rel (%p158) target = $region16
      $region15: #{tpu_custom_call.1} parent=5 // pred_region
        // Predicated region
        $region17: #{tpu_custom_call.1} parent=15 // pred_check
          %p161 = pneg %p56
        $region18: #{tpu_custom_call.1} parent=15 // pred_check_branch
          %163 = sbr.rel (%p161) target = $region20
        $region19: #{tpu_custom_call.1} parent=15 // pred_region
          %s164 = sand.u32 %s46, 1
          %s165 = scalar_lea.sflag [#allocation3], %s164
          %s166 = sand.u32 %s46, 1
          %s167 = smul.addr %s166, 32
          %s168 = scalar_lea.vmem [#allocation2], %s167
          %s169 = smul.u32 4, %s30
          %s171 = ssub.s32 512, 512
          %172 = vsyncadd %s165, %s171
          %s173 = smul.addr %s29, 4
          %s174 = sadd.s32 %s169, %s173
          %s175 = smul.addr %s174, 128
          %s176 = scalar_lea.hbm %s0, %s175
          %s177 = sshll.u32 %s168, 4
          %s178 = int_to_ptr.vmem [resolvable:$true] %s177
          %183 = dma.hbm_to_vmem [thread:$0]  %s176, 512, %s178, %s165, 128, 128, 8
        $region20: #{tpu_custom_call.1} parent=15 // pred_fallthru
          _
        // Predicated region
        $region21: #{tpu_custom_call.1} parent=15 // pred_check
          %p184 = pneg %p84
        $region22: #{tpu_custom_call.1} parent=15 // pred_check_branch
          %186 = sbr.rel (%p184) target = $region24
        $region23: #{tpu_custom_call.1} parent=15 // pred_region
          %s187 = sand.u32 %s74, 1
          %s188 = scalar_lea.sflag [#allocation6], %s187
          %s189 = sand.u32 %s74, 1
          %s190 = smul.addr %s189, 32
          %s191 = scalar_lea.vmem [#allocation5], %s190
          %s192 = smul.u32 4, %s30
          %s194 = ssub.s32 512, 512
          %195 = vsyncadd %s188, %s194
          %s196 = smul.addr %s29, 4
          %s197 = sadd.s32 %s192, %s196
          %s198 = smul.addr %s197, 128
          %s199 = scalar_lea.hbm %s1, %s198
          %s200 = sshll.u32 %s191, 4
          %s201 = int_to_ptr.vmem [resolvable:$true] %s200
          %206 = dma.hbm_to_vmem [thread:$0]  %s199, 512, %s201, %s188, 128, 128, 8
        $region24: #{tpu_custom_call.1} parent=15 // pred_fallthru
          _
      $region16: #{tpu_custom_call.1} parent=5 // pred_fallthru
        _
      %p207 = scmp.le.s32.totalorder 1, %s22
      %p208 = scmp.lt.s32.totalorder %s22, 3
      %p209 = pnand %p207, %p208
      %p210 = pneg %p209
      // Predicated region
      $region25: #{tpu_custom_call.1} parent=5 // pred_check
        _
      $region26: #{tpu_custom_call.1} parent=5 // pred_check_branch
        %212 = sbr.rel (%p209) target = $region28
      $region27: #{tpu_custom_call.1} parent=5 // pred_region
        %s213 = ssub.s32 %s22, 1
        %s214 = sand.u32 %s49, 1
        %s215 = scalar_lea.sflag [#allocation3], %s214
        %s216 = sand.u32 %s49, 1
        %s217 = smul.addr %s216, 32
        %s218 = scalar_lea.vmem [#allocation2], %s217
        // Predicated region
        $region29: #{tpu_custom_call.1} parent=27 // pred_check
          %p219 = pneg %p62
        $region30: #{tpu_custom_call.1} parent=27 // pred_check_branch
          %221 = sbr.rel (%p219) target = $region32
        $region31: #{tpu_custom_call.1} parent=27 // pred_region
          %222 = dma.done %s215, 512
        $region32: #{tpu_custom_call.1} parent=27 // pred_fallthru
          _
        %s223 = sand.u32 %s77, 1
        %s224 = scalar_lea.sflag [#allocation6], %s223
        %s225 = sand.u32 %s77, 1
        %s226 = smul.addr %s225, 32
        %s227 = scalar_lea.vmem [#allocation5], %s226
        // Predicated region
        $region33: #{tpu_custom_call.1} parent=27 // pred_check
          %p228 = pneg %p90
        $region34: #{tpu_custom_call.1} parent=27 // pred_check_branch
          %230 = sbr.rel (%p228) target = $region36
        $region35: #{tpu_custom_call.1} parent=27 // pred_region
          %231 = dma.done %s224, 512
        $region36: #{tpu_custom_call.1} parent=27 // pred_fallthru
          _
        %s232 = sand.u32 %s49, 1
        %s233 = scalar_lea.sflag [#allocation3], %s232
        %s234 = sand.u32 %s49, 1
        %s235 = smul.addr %s234, 32
        %s236 = scalar_lea.vmem [#allocation2], %s235
        %p237 = pneg %p62
        %p238 = pneg %p59
        %s239 = sand.u32 %s77, 1
        %s240 = scalar_lea.sflag [#allocation6], %s239
        %s241 = sand.u32 %s77, 1
        %s242 = smul.addr %s241, 32
        %s243 = scalar_lea.vmem [#allocation5], %s242
        %p244 = pneg %p90
        %p245 = pneg %p87
        %p246 = pneg %p116
        %p247 = pneg %p113
        %s248 = sand.u32 %s103, 1
        %s249 = scalar_lea.sflag [#allocation4], %s248
        %s250 = sand.u32 %s103, 1
        %s251 = smul.addr %s250, 8
        %s252 = scalar_lea.vmem [#allocation7], %s251
        %p253 = pneg %p142
        %p254 = pneg %p139
        %s255 = sand.u32 %s129, 1
        %s256 = scalar_lea.sflag [#allocation9], %s255
        %s257 = sand.u32 %s129, 1
        %s258 = smul.addr %s257, 8
        %s259 = scalar_lea.vmem [#allocation8], %s258
        %s260 = smul.u32 4, %s32
        %s261 = smul.u32 4, %s32
        %p262 = scmp.eq.s32.totalorder %s32, 0
        // Predicated region
        $region37: #{tpu_custom_call.1} parent=27 // pred_check
          %p263 = pneg %p262
        $region38: #{tpu_custom_call.1} parent=27 // pred_check_branch
          %265 = sbr.rel (%p263) target = $region40
        $region39: #{tpu_custom_call.1} parent=27 // pred_region
          %266 = vst [vmem:[%s252] sm:$0xff] 0.0
          %267 = vst [vmem:[%s259] sm:$0xff] 0.0
        $region40: #{tpu_custom_call.1} parent=27 // pred_fallthru
          _
        %v268 = vld [vmem:[%s218] sm:$0xff]
        %v269 = vld [vmem:[%s218 + $0x8] sm:$0xff]
        %v270 = vld [vmem:[%s218 + $0x10] sm:$0xff]
        %v271 = vld [vmem:[%s218 + $0x18] sm:$0xff]
        %v272 = vld [vmem:[%s227] sm:$0xff]
        %v273 = vld [vmem:[%s227 + $0x8] sm:$0xff]
        %v274 = vld [vmem:[%s227 + $0x10] sm:$0xff]
        %v275 = vld [vmem:[%s227 + $0x18] sm:$0xff]
        %v276 = vld [vmem:[%s252] sm:$0xff]
        %v277 = vmul.f32 %v268, %v272
        %v278 = vmul.f32 %v269, %v273
        %v279 = vmul.f32 %v270, %v274
        %v280 = vmul.f32 %v271, %v275
        %v281 = vadd.f32 %v277, %v278
        %v282 = vadd.f32 %v281, %v279
        %v283 = vadd.f32 %v282, %v280
        %v284 = vadd.f32 %v276, %v283
        %285 = vst [vmem:[%s252] sm:$0xff] %v284
        %v286 = vld [vmem:[%s259] sm:$0xff]
        %v287 = vadd.f32 %v268, %v272
        %v288 = vadd.f32 %v269, %v273
        %v289 = vadd.f32 %v270, %v274
        %v290 = vadd.f32 %v271, %v275
        %v291 = vadd.f32 %v287, %v288
        %v292 = vadd.f32 %v291, %v289
        %v293 = vadd.f32 %v292, %v290
        %v294 = vadd.f32 %v286, %v293
        %295 = vst [vmem:[%s259] sm:$0xff] %v294
        %s296 = sand.u32 %s103, 1
        %s297 = scalar_lea.sflag [#allocation4], %s296
        %s298 = sand.u32 %s103, 1
        %s299 = smul.addr %s298, 8
        %s300 = scalar_lea.vmem [#allocation7], %s299
        %s301 = sand.u32 %s129, 1
        %s302 = scalar_lea.sflag [#allocation9], %s301
        %s303 = sand.u32 %s129, 1
        %s304 = smul.addr %s303, 8
        %s305 = scalar_lea.vmem [#allocation8], %s304
        // Predicated region
        $region41: #{tpu_custom_call.1} parent=27 // pred_check
          %p306 = pneg %p113
        $region42: #{tpu_custom_call.1} parent=27 // pred_check_branch
          %308 = sbr.rel (%p306) target = $region44
        $region43: #{tpu_custom_call.1} parent=27 // pred_region
          %s310 = ssub.s32 128, 128
          %311 = vsyncadd %s297, %s310
          %s312 = smul.addr %s31, 128
          %s313 = scalar_lea.hbm %s2, %s312
          %s315 = sshll.u32 %s300, 4
          %s316 = int_to_ptr.vmem [resolvable:$true] %s315
          %318 = dma.vmem_to_hbm [thread:$0]  %s316, 128, %s313, %s297
        $region44: #{tpu_custom_call.1} parent=27 // pred_fallthru
          _
        // Predicated region
        $region45: #{tpu_custom_call.1} parent=27 // pred_check
          %p319 = pneg %p139
        $region46: #{tpu_custom_call.1} parent=27 // pred_check_branch
          %321 = sbr.rel (%p319) target = $region48
        $region47: #{tpu_custom_call.1} parent=27 // pred_region
          %s323 = ssub.s32 128, 128
          %324 = vsyncadd %s302, %s323
          %s325 = smul.addr %s31, 128
          %s326 = scalar_lea.hbm %s3, %s325
          %s328 = sshll.u32 %s305, 4
          %s329 = int_to_ptr.vmem [resolvable:$true] %s328
          %331 = dma.vmem_to_hbm [thread:$0]  %s329, 128, %s326, %s302
        $region48: #{tpu_custom_call.1} parent=27 // pred_fallthru
          _
      $region28: #{tpu_custom_call.1} parent=5 // pred_fallthru
        _
      %p332 = scmp.le.s32.totalorder 2, %s22
      // Predicated region
      $region49: #{tpu_custom_call.1} parent=5 // pred_check
        %p333 = pneg %p332
      $region50: #{tpu_custom_call.1} parent=5 // pred_check_branch
        %335 = sbr.rel (%p333) target = $region52
      $region51: #{tpu_custom_call.1} parent=5 // pred_region
        %s336 = ssub.s32 %s22, 2
        // Predicated region
        $region53: #{tpu_custom_call.1} parent=51 // pred_check
          %p337 = pneg %p119
        $region54: #{tpu_custom_call.1} parent=51 // pred_check_branch
          %339 = sbr.rel (%p337) target = $region56
        $region55: #{tpu_custom_call.1} parent=51 // pred_region
          %s340 = sand.u32 %s104, 1
          %s341 = scalar_lea.sflag [#allocation4], %s340
          %s342 = sand.u32 %s104, 1
          %s343 = smul.addr %s342, 8
          %s344 = scalar_lea.vmem [#allocation7], %s343
          %345 = dma.done %s341, 128
        $region56: #{tpu_custom_call.1} parent=51 // pred_fallthru
          _
        // Predicated region
        $region57: #{tpu_custom_call.1} parent=51 // pred_check
          %p346 = pneg %p145
        $region58: #{tpu_custom_call.1} parent=51 // pred_check_branch
          %348 = sbr.rel (%p346) target = $region60
        $region59: #{tpu_custom_call.1} parent=51 // pred_region
          %s349 = sand.u32 %s130, 1
          %s350 = scalar_lea.sflag [#allocation9], %s349
          %s351 = sand.u32 %s130, 1
          %s352 = smul.addr %s351, 8
          %s353 = scalar_lea.vmem [#allocation8], %s352
          %354 = dma.done %s350, 128
        $region60: #{tpu_custom_call.1} parent=51 // pred_fallthru
          _
      $region52: #{tpu_custom_call.1} parent=5 // pred_fallthru
        _
    $region6: #{tpu_custom_call.1} parent=1 // loop_footer
      %s26 = sadd.s32 1, %s22
    $region7: #{tpu_custom_call.1} parent=1 // loop_footer_branch
      %21 = sbr.rel target = $region3
    $region8: #{tpu_custom_call.1} parent=1 // loop_exit
      _
    %355 = vsyncpa [#allocation3], 1
    %s356 = scalar_lea.sflag [#allocation3], 1
    %357 = vsyncpa %s356, 1
    %358 = vsyncpa [#allocation6], 1
    %s359 = scalar_lea.sflag [#allocation6], 1
    %360 = vsyncpa %s359, 1
    %361 = vsyncpa [#allocation4], 1
    %s362 = scalar_lea.sflag [#allocation4], 1
    %363 = vsyncpa %s362, 1
    %364 = vsyncpa [#allocation9], 1
    %s365 = scalar_lea.sflag [#allocation9], 1
    %366 = vsyncpa %s365, 1

</llo_original>
